<compile_context>
chip_gen: v6e
topology: v6e:2x2x1
jax: 0.10.0
libtpu: 0.0.40
codegen_flags: <defaults>
</compile_context>

<pallas_src>
import functools

import jax
import jax.numpy as jnp
from jax.experimental import pallas as pl
from jax.experimental.pallas import tpu as pltpu


def _round_up(a, b):
    return (a + b - 1) // b * b


# --------------------------------------------------------------------------
# Phase 1: conv-as-GEMM + global per-channel sum / sum-of-squares
# --------------------------------------------------------------------------
def _matmul_stats_kernel(w_ref, p_ref, y_ref, sum_ref, sumsq_ref):
    # (E, Kp) @ (Kp, TM) -> (E, TM); bf16 operands, f32 accumulation on MXU.
    y = jnp.dot(w_ref[...], p_ref[...], preferred_element_type=jnp.float32)
    y_ref[...] = y

    @pl.when(pl.program_id(0) == 0)
    def _init():
        sum_ref[...] = jnp.zeros_like(sum_ref)
        sumsq_ref[...] = jnp.zeros_like(sumsq_ref)

    # Cross-lane (XLU) reduction over the M tile; the (E, 1) accumulator
    # blocks stay VMEM-resident across the whole grid (constant index_map).
    sum_ref[...] += jnp.sum(y, axis=-1, keepdims=True)
    sumsq_ref[...] += jnp.sum(y * y, axis=-1, keepdims=True)


# --------------------------------------------------------------------------
# Phase 2: normalize with per-channel scale / shift derived from the stats
# --------------------------------------------------------------------------
def _normalize_kernel(y_ref, sum_ref, sumsq_ref, gamma_ref, beta_ref, out_ref,
                      *, inv_m, eps):
    mean = sum_ref[...] * inv_m                                   # (E, 1)
    var = jnp.maximum(sumsq_ref[...] * inv_m - mean * mean, 0.0)  # biased var
    scale = gamma_ref[...] * jax.lax.rsqrt(var + eps)             # EUP rsqrt
    shift = beta_ref[...] - mean * scale
    out_ref[...] = y_ref[...] * scale + shift                     # 2 VPU ops/elt


@functools.partial(jax.jit, static_argnames=("stride", "eps", "tile_m"))
def overlap_patch_embed(x, w, b, gamma, beta, *, stride=4, eps=1e-5,
                        tile_m=512):
    """x: (N, C, H, W) f32; w: (E, C, kh, kw); b, gamma, beta: (E,).

    Returns (y, Hout, Wout) with y in NCHW, matching the PyTorch module
    forward (BatchNorm2d in training mode, gamma/beta as given).
    """
    N, C, H, W = x.shape
    E, _, kh, kw = w.shape
    ph, pw = kh // 2, kw // 2
    Hout = (H + 2 * ph - kh) // stride + 1
    Wout = (W + 2 * pw - kw) // stride + 1
    del b  # exactly cancelled by training-mode BN mean subtraction

    M = N * Hout * Wout
    K = C * kh * kw
    TM = max(128, _round_up(min(tile_m, M), 128))   # lane tile, mult. of 128
    M_pad = _round_up(M, TM)
    K_pad = _round_up(K, 128)
    num_tiles = M_pad // TM

    # ---- glue: im2col to (K, M), transposed orientation, bf16 operands ----
    xp = jnp.pad(x, ((0, 0), (0, 0), (ph, ph), (pw, pw)))
    i_idx = jnp.arange(Hout)[:, None] * stride + jnp.arange(kh)[None, :]
    j_idx = jnp.arange(Wout)[:, None] * stride + jnp.arange(kw)[None, :]
    # -> (N, C, Hout, kh, Wout, kw)
    patches = xp[:, :, i_idx[:, :, None, None], j_idx[None, None, :, :]]
    # -> (C, kh, kw, N, Hout, Wout) -> (K, M)
    patches_t = patches.transpose(1, 3, 5, 0, 2, 4).reshape(K, M)
    patches_t = jnp.pad(patches_t,
                        ((0, K_pad - K), (0, M_pad - M))).astype(jnp.bfloat16)

    w_mat = jnp.pad(w.reshape(E, K).astype(jnp.float32),
                    ((0, 0), (0, K_pad - K))).astype(jnp.bfloat16)   # (E, Kp)
    g2 = gamma.reshape(E, 1).astype(jnp.float32)
    bt2 = beta.reshape(E, 1).astype(jnp.float32)

    # ---- phase 1: tiled GEMM + global batch statistics ----
    y_flat, ch_sum, ch_sumsq = pl.pallas_call(
        _matmul_stats_kernel,
        out_shape=(
            jax.ShapeDtypeStruct((E, M_pad), jnp.float32),
            jax.ShapeDtypeStruct((E, 1), jnp.float32),
            jax.ShapeDtypeStruct((E, 1), jnp.float32),
        ),
        grid=(num_tiles,),
        in_specs=[
            pl.BlockSpec((E, K_pad), lambda i: (0, 0)),
            pl.BlockSpec((K_pad, TM), lambda i: (0, i)),
        ],
        out_specs=(
            pl.BlockSpec((E, TM), lambda i: (0, i)),
            pl.BlockSpec((E, 1), lambda i: (0, 0)),
            pl.BlockSpec((E, 1), lambda i: (0, 0)),
        ),
        compiler_params=pltpu.CompilerParams(
            dimension_semantics=("arbitrary",)),
    )(w_mat, patches_t)

    # ---- phase 2: normalize (independent tiles -> "parallel") ----
    out_flat = pl.pallas_call(
        functools.partial(_normalize_kernel, inv_m=float(1.0 / M),
                          eps=float(eps)),
        out_shape=jax.ShapeDtypeStruct((E, M_pad), jnp.float32),
        grid=(num_tiles,),
        in_specs=[
            pl.BlockSpec((E, TM), lambda i: (0, i)),
            pl.BlockSpec((E, 1), lambda i: (0, 0)),
            pl.BlockSpec((E, 1), lambda i: (0, 0)),
            pl.BlockSpec((E, 1), lambda i: (0, 0)),
            pl.BlockSpec((E, 1), lambda i: (0, 0)),
        ],
        out_specs=pl.BlockSpec((E, TM), lambda i: (0, i)),
        compiler_params=pltpu.CompilerParams(
            dimension_semantics=("parallel",)),
    )(y_flat, ch_sum, ch_sumsq, g2, bt2)

    # glue: (E, M) -> (N, E, Hout, Wout)
    y = out_flat[:, :M].reshape(E, N, Hout, Wout).transpose(1, 0, 2, 3)
    return y, Hout, Wout


def _reference(x, w, b, gamma, beta, stride, eps):
    """Pure-JAX reference (lax conv + batch-stat BN) for sanity checking."""
    kh, kw = w.shape[2], w.shape[3]
    y = jax.lax.conv_general_dilated(
        x, w, (stride, stride),
        padding=[(kh // 2, kh // 2), (kw // 2, kw // 2)],
        dimension_numbers=("NCHW", "OIHW", "NCHW"),
        precision=jax.lax.Precision.HIGHEST)
    y = y + b[None, :, None, None]
    mean = y.mean(axis=(0, 2, 3), keepdims=True)
    var = ((y - mean) ** 2).mean(axis=(0, 2, 3), keepdims=True)
    y_hat = (y - mean) / jnp.sqrt(var + eps)
    return y_hat * gamma[None, :, None, None] + beta[None, :, None, None]


if __name__ == "__main__":
    # Shapes consistent with the module's forward:
    # in_chans=4, embed_dim=32, patch_size=7, stride=4, img 16x16, batch 2.
    N, C, H, W = 2, 4, 16, 16
    E, K_SZ, STRIDE = 32, 7, 4

    key = jax.random.PRNGKey(0)
    kx, kw_, kb = jax.random.split(key, 3)
    x = jax.random.normal(kx, (N, C, H, W), dtype=jnp.float32)
    w = 0.05 * jax.random.normal(kw_, (E, C, K_SZ, K_SZ), dtype=jnp.float32)
    b = 0.1 * jax.random.normal(kb, (E,), dtype=jnp.float32)
    gamma = jnp.ones((E,), dtype=jnp.float32)   # BN weight default
    beta = jnp.zeros((E,), dtype=jnp.float32)   # BN bias default

    y, Hout, Wout = overlap_patch_embed(x, w, b, gamma, beta,
                                        stride=STRIDE, eps=1e-5)
    y = jax.block_until_ready(y)
    assert y.shape == (N, E, Hout, Wout), y.shape
    assert (Hout, Wout) == (4, 4), (Hout, Wout)

    y_ref = _reference(x, w, b, gamma, beta, STRIDE, 1e-5)
    assert jnp.allclose(y, y_ref, atol=5e-2, rtol=5e-2), (
        float(jnp.max(jnp.abs(y - y_ref))))

    # Second check: multi-tile path (3 M-tiles incl. a zero-padded tail) to
    # exercise the cross-tile BN accumulation and tile padding logic.
    x2 = jax.random.normal(jax.random.PRNGKey(1), (2, 4, 48, 48),
                           dtype=jnp.float32)
    y2, H2, W2 = overlap_patch_embed(x2, w, b, gamma, beta,
                                     stride=STRIDE, eps=1e-5, tile_m=128)
    y2 = jax.block_until_ready(y2)
    y2_ref = _reference(x2, w, b, gamma, beta, STRIDE, 1e-5)
    assert y2.shape == (2, E, H2, W2), y2.shape
    assert jnp.allclose(y2, y2_ref, atol=5e-2, rtol=5e-2), (
        float(jnp.max(jnp.abs(y2 - y2_ref))))

    print("KERNEL_OK")
</pallas_src>

<mosaic_0001>
module attributes {stable_mosaic.version = 11 : i64} {
  func.func @_matmul_stats_kernel(%arg0: i32, %arg1: memref<32x256xbf16, #tpu.memory_space<vmem>>, %arg2: memref<256x128xbf16, #tpu.memory_space<vmem>>, %arg3: memref<32x128xf32, #tpu.memory_space<vmem>>, %arg4: memref<32x1xf32, #tpu.memory_space<vmem>>, %arg5: memref<32x1xf32, #tpu.memory_space<vmem>>) attributes {dimension_semantics = [#tpu.dimension_semantics<arbitrary>], iteration_bounds = array<i64: 1>, scalar_prefetch = 0 : i64, scratch_operands = 0 : i64, tpu.core_type = #tpu.core_type<tc>, window_params = [{pipeline_mode = #tpu.pipeline_mode<synchronous>, transform_indices = @transform_0, window_bounds = array<i64: 32, 256>}, {transform_indices = @transform_1, window_bounds = array<i64: 256, 128>}, {transform_indices = @transform_2, window_bounds = array<i64: 32, 128>}, {pipeline_mode = #tpu.pipeline_mode<synchronous>, transform_indices = @transform_3, window_bounds = array<i64: 32, 1>}, {pipeline_mode = #tpu.pipeline_mode<synchronous>, transform_indices = @transform_4, window_bounds = array<i64: 32, 1>}]} {
    %c0 = arith.constant 0 : index
    %c0_0 = arith.constant 0 : index
    %0 = vector.load %arg1[%c0, %c0_0] : memref<32x256xbf16, #tpu.memory_space<vmem>>, vector<32x256xbf16>
    %c0_1 = arith.constant 0 : index
    %c0_2 = arith.constant 0 : index
    %1 = vector.load %arg2[%c0_1, %c0_2] : memref<256x128xbf16, #tpu.memory_space<vmem>>, vector<256x128xbf16>
    %cst = arith.constant dense<0.000000e+00> : vector<32x128xf32>
    %2 = tpu.matmul %0, %1, %cst {dimension_numbers = #tpu.dot_dimension_numbers<[1], [0], [0], [1], [0, 0, 1, 1], [], []>} : vector<32x256xbf16>, vector<256x128xbf16>, vector<32x128xf32> -> vector<32x128xf32>
    %c0_3 = arith.constant 0 : index
    %c0_4 = arith.constant 0 : index
    %3 = vector.load %arg3[%c0_3, %c0_4] : memref<32x128xf32, #tpu.memory_space<vmem>>, vector<32x128xf32>
    tpu.vector_store %arg3[%c0_3, %c0_4], %2 {strides = array<i32>} : memref<32x128xf32, #tpu.memory_space<vmem>>, vector<32x128xf32>,
    %c0_i32 = arith.constant 0 : i32
    %4 = arith.cmpi eq, %arg0, %c0_i32 : i32
    %5 = arith.extui %4 : i1 to i32
    %c0_i32_5 = arith.constant 0 : i32
    %6 = arith.cmpi ne, %5, %c0_i32_5 : i32
    scf.if %6 {
      %cst_16 = arith.constant 0.000000e+00 : f32
      %18 = vector.broadcast %cst_16 : f32 to vector<32x1xf32>
      %c0_17 = arith.constant 0 : index
      %c0_18 = arith.constant 0 : index
      %19 = vector.load %arg4[%c0_17, %c0_18] : memref<32x1xf32, #tpu.memory_space<vmem>>, vector<32x1xf32>
      tpu.vector_store %arg4[%c0_17, %c0_18], %18 {strides = array<i32>} : memref<32x1xf32, #tpu.memory_space<vmem>>, vector<32x1xf32>,
      %cst_19 = arith.constant 0.000000e+00 : f32
      %20 = vector.broadcast %cst_19 : f32 to vector<32x1xf32>
      %c0_20 = arith.constant 0 : index
      %c0_21 = arith.constant 0 : index
      %21 = vector.load %arg5[%c0_20, %c0_21] : memref<32x1xf32, #tpu.memory_space<vmem>>, vector<32x1xf32>
      tpu.vector_store %arg5[%c0_20, %c0_21], %20 {strides = array<i32>} : memref<32x1xf32, #tpu.memory_space<vmem>>, vector<32x1xf32>,
    } else {
    }
    %c0_6 = arith.constant 0 : index
    %c0_7 = arith.constant 0 : index
    %7 = vector.load %arg4[%c0_6, %c0_7] : memref<32x1xf32, #tpu.memory_space<vmem>>, vector<32x1xf32>
    %cst_8 = arith.constant dense<0.000000e+00> : vector<32xf32>
    %8 = vector.multi_reduction <add>, %2, %cst_8 [1] : vector<32x128xf32> to vector<32xf32>
    %9 = vector.shape_cast %8 : vector<32xf32> to vector<32x1xf32>
    %10 = arith.addf %7, %9 : vector<32x1xf32>
    %c0_9 = arith.constant 0 : index
    %c0_10 = arith.constant 0 : index
    %11 = vector.load %arg4[%c0_9, %c0_10] : memref<32x1xf32, #tpu.memory_space<vmem>>, vector<32x1xf32>
    tpu.vector_store %arg4[%c0_9, %c0_10], %10 {strides = array<i32>} : memref<32x1xf32, #tpu.memory_space<vmem>>, vector<32x1xf32>,
    %c0_11 = arith.constant 0 : index
    %c0_12 = arith.constant 0 : index
    %12 = vector.load %arg5[%c0_11, %c0_12] : memref<32x1xf32, #tpu.memory_space<vmem>>, vector<32x1xf32>
    %13 = arith.mulf %2, %2 : vector<32x128xf32>
    %cst_13 = arith.constant dense<0.000000e+00> : vector<32xf32>
    %14 = vector.multi_reduction <add>, %13, %cst_13 [1] : vector<32x128xf32> to vector<32xf32>
    %15 = vector.shape_cast %14 : vector<32xf32> to vector<32x1xf32>
    %16 = arith.addf %12, %15 : vector<32x1xf32>
    %c0_14 = arith.constant 0 : index
    %c0_15 = arith.constant 0 : index
    %17 = vector.load %arg5[%c0_14, %c0_15] : memref<32x1xf32, #tpu.memory_space<vmem>>, vector<32x1xf32>
    tpu.vector_store %arg5[%c0_14, %c0_15], %16 {strides = array<i32>} : memref<32x1xf32, #tpu.memory_space<vmem>>, vector<32x1xf32>,
    return
  }
  func.func @transform_0(%arg0: i32) -> (i32, i32) {
    %c0_i32 = arith.constant 0 : i32
    %c0_i32_0 = arith.constant 0 : i32
    %c0_i32_1 = arith.constant 0 : i32
    return %c0_i32, %c0_i32_0 : i32, i32
  }
  func.func @transform_1(%arg0: i32) -> (i32, i32) {
    %c0_i32 = arith.constant 0 : i32
    %c0_i32_0 = arith.constant 0 : i32
    return %c0_i32, %arg0 : i32, i32
  }
  func.func @transform_2(%arg0: i32) -> (i32, i32) {
    %c0_i32 = arith.constant 0 : i32
    %c0_i32_0 = arith.constant 0 : i32
    return %c0_i32, %arg0 : i32, i32
  }
  func.func @transform_3(%arg0: i32) -> (i32, i32) {
    %c0_i32 = arith.constant 0 : i32
    %c0_i32_0 = arith.constant 0 : i32
    %c0_i32_1 = arith.constant 0 : i32
    return %c0_i32, %c0_i32_0 : i32, i32
  }
  func.func @transform_4(%arg0: i32) -> (i32, i32) {
    %c0_i32 = arith.constant 0 : i32
    %c0_i32_0 = arith.constant 0 : i32
    %c0_i32_1 = arith.constant 0 : i32
    return %c0_i32, %c0_i32_0 : i32, i32
  }
}

module attributes {stable_mosaic.version = 11 : i64} {
  func.func @_normalize_kernel(%arg0: i32, %arg1: memref<32x128xf32, #tpu.memory_space<vmem>>, %arg2: memref<32x1xf32, #tpu.memory_space<vmem>>, %arg3: memref<32x1xf32, #tpu.memory_space<vmem>>, %arg4: memref<32x1xf32, #tpu.memory_space<vmem>>, %arg5: memref<32x1xf32, #tpu.memory_space<vmem>>, %arg6: memref<32x128xf32, #tpu.memory_space<vmem>>) attributes {dimension_semantics = [#tpu.dimension_semantics<parallel>], iteration_bounds = array<i64: 1>, scalar_prefetch = 0 : i64, scratch_operands = 0 : i64, tpu.core_type = #tpu.core_type<tc>, window_params = [{transform_indices = @transform_0, window_bounds = array<i64: 32, 128>}, {pipeline_mode = #tpu.pipeline_mode<synchronous>, transform_indices = @transform_1, window_bounds = array<i64: 32, 1>}, {pipeline_mode = #tpu.pipeline_mode<synchronous>, transform_indices = @transform_2, window_bounds = array<i64: 32, 1>}, {pipeline_mode = #tpu.pipeline_mode<synchronous>, transform_indices = @transform_3, window_bounds = array<i64: 32, 1>}, {pipeline_mode = #tpu.pipeline_mode<synchronous>, transform_indices = @transform_4, window_bounds = array<i64: 32, 1>}, {transform_indices = @transform_5, window_bounds = array<i64: 32, 128>}]} {
    %c0 = arith.constant 0 : index
    %c0_0 = arith.constant 0 : index
    %0 = vector.load %arg2[%c0, %c0_0] : memref<32x1xf32, #tpu.memory_space<vmem>>, vector<32x1xf32>
    %cst = arith.constant 3.125000e-02 : f32
    %1 = vector.broadcast %cst : f32 to vector<32x1xf32>
    %2 = arith.mulf %0, %1 : vector<32x1xf32>
    %c0_1 = arith.constant 0 : index
    %c0_2 = arith.constant 0 : index
    %3 = vector.load %arg3[%c0_1, %c0_2] : memref<32x1xf32, #tpu.memory_space<vmem>>, vector<32x1xf32>
    %cst_3 = arith.constant 3.125000e-02 : f32
    %4 = vector.broadcast %cst_3 : f32 to vector<32x1xf32>
    %5 = arith.mulf %3, %4 : vector<32x1xf32>
    %6 = arith.mulf %2, %2 : vector<32x1xf32>
    %7 = arith.subf %5, %6 : vector<32x1xf32>
    %cst_4 = arith.constant 0.000000e+00 : f32
    %8 = vector.broadcast %cst_4 : f32 to vector<32x1xf32>
    %9 = arith.maximumf %7, %8 : vector<32x1xf32>
    %c0_5 = arith.constant 0 : index
    %c0_6 = arith.constant 0 : index
    %10 = vector.load %arg4[%c0_5, %c0_6] : memref<32x1xf32, #tpu.memory_space<vmem>>, vector<32x1xf32>
    %cst_7 = arith.constant 9.99999974E-6 : f32
    %11 = vector.broadcast %cst_7 : f32 to vector<32x1xf32>
    %12 = arith.addf %9, %11 : vector<32x1xf32>
    %13 = math.rsqrt %12 : vector<32x1xf32>
    %14 = arith.mulf %10, %13 : vector<32x1xf32>
    %c0_8 = arith.constant 0 : index
    %c0_9 = arith.constant 0 : index
    %15 = vector.load %arg5[%c0_8, %c0_9] : memref<32x1xf32, #tpu.memory_space<vmem>>, vector<32x1xf32>
    %16 = arith.mulf %2, %14 : vector<32x1xf32>
    %17 = arith.subf %15, %16 : vector<32x1xf32>
    %c0_10 = arith.constant 0 : index
    %c0_11 = arith.constant 0 : index
    %18 = vector.load %arg1[%c0_10, %c0_11] : memref<32x128xf32, #tpu.memory_space<vmem>>, vector<32x128xf32>
    %19 = vector.broadcast %14 : vector<32x1xf32> to vector<32x128xf32>
    %20 = arith.mulf %18, %19 : vector<32x128xf32>
    %21 = vector.broadcast %17 : vector<32x1xf32> to vector<32x128xf32>
    %22 = arith.addf %20, %21 : vector<32x128xf32>
    %c0_12 = arith.constant 0 : index
    %c0_13 = arith.constant 0 : index
    %23 = vector.load %arg6[%c0_12, %c0_13] : memref<32x128xf32, #tpu.memory_space<vmem>>, vector<32x128xf32>
    tpu.vector_store %arg6[%c0_12, %c0_13], %22 {strides = array<i32>} : memref<32x128xf32, #tpu.memory_space<vmem>>, vector<32x128xf32>,
    return
  }
  func.func @transform_0(%arg0: i32) -> (i32, i32) {
    %c0_i32 = arith.constant 0 : i32
    %c0_i32_0 = arith.constant 0 : i32
    return %c0_i32, %arg0 : i32, i32
  }
  func.func @transform_1(%arg0: i32) -> (i32, i32) {
    %c0_i32 = arith.constant 0 : i32
    %c0_i32_0 = arith.constant 0 : i32
    %c0_i32_1 = arith.constant 0 : i32
    return %c0_i32, %c0_i32_0 : i32, i32
  }
  func.func @transform_2(%arg0: i32) -> (i32, i32) {
    %c0_i32 = arith.constant 0 : i32
    %c0_i32_0 = arith.constant 0 : i32
    %c0_i32_1 = arith.constant 0 : i32
    return %c0_i32, %c0_i32_0 : i32, i32
  }
  func.func @transform_3(%arg0: i32) -> (i32, i32) {
    %c0_i32 = arith.constant 0 : i32
    %c0_i32_0 = arith.constant 0 : i32
    %c0_i32_1 = arith.constant 0 : i32
    return %c0_i32, %c0_i32_0 : i32, i32
  }
  func.func @transform_4(%arg0: i32) -> (i32, i32) {
    %c0_i32 = arith.constant 0 : i32
    %c0_i32_0 = arith.constant 0 : i32
    %c0_i32_1 = arith.constant 0 : i32
    return %c0_i32, %c0_i32_0 : i32, i32
  }
  func.func @transform_5(%arg0: i32) -> (i32, i32) {
    %c0_i32 = arith.constant 0 : i32
    %c0_i32_0 = arith.constant 0 : i32
    return %c0_i32, %arg0 : i32, i32
  }
}

</mosaic_0001>

<llo_original>
// kernel: overlap_patch_embed.3
$region0: #{overlap_patch_embed.3}
  #allocation0 [shape = 'u32[]', space=smem, size = 0x4, offset = 0x4, fixed_abs, tag = 'smem constant byte address 0x4 - core index']
  #allocation1 [shape = 'u32[144,128]{1,0:T(1,128)}', space=vmem, size = 0x12000, scoped, tag = 'internal scratch']
  %s0 = inlined_call_operand.vmem [shape: f32[32,128], index: 0, kind: input, shape index: {}]
  %s1 = inlined_call_operand.vmem [shape: f32[32,1], index: 1, kind: input, shape index: {}]
  %s2 = inlined_call_operand.vmem [shape: f32[32,1], index: 2, kind: input, shape index: {}]
  %s3 = inlined_call_operand.vmem [shape: f32[32,1], index: 3, kind: input, shape index: {}]
  %s4 = inlined_call_operand.vmem [shape: f32[32,1], index: 4, kind: input, shape index: {}]
  %s5 = inlined_call_operand.vmem [shape: f32[32,128], index: 5, kind: output, shape index: {}]
  %s6 = sld [smem:[#allocation0]]
  $region30: #{overlap_patch_embed.3} parent=0
    _
  %s8 = ssub.s32 1, %s6
  %s9 = scalar_select 0, %s8, %s6
  // Predicated region
  $region2: #{overlap_patch_embed.3} parent=0 // pred_check
    _
  $region3: #{overlap_patch_embed.3} parent=0 // pred_check_branch
    %11 = sbr.rel (0) target = $region5
  $region4: #{overlap_patch_embed.3} parent=0 // pred_region
    _
  $region5: #{overlap_patch_embed.3} parent=0 // pred_fallthru
    _
  // Predicated region
  $region6: #{overlap_patch_embed.3} parent=0 // pred_check
    _
  $region7: #{overlap_patch_embed.3} parent=0 // pred_check_branch
    %13 = sbr.rel (0) target = $region9
  $region8: #{overlap_patch_embed.3} parent=0 // pred_region
    _
  $region9: #{overlap_patch_embed.3} parent=0 // pred_fallthru
    _
  // Predicated region
  $region10: #{overlap_patch_embed.3} parent=0 // pred_check
    _
  $region11: #{overlap_patch_embed.3} parent=0 // pred_check_branch
    %15 = sbr.rel (0) target = $region13
  $region12: #{overlap_patch_embed.3} parent=0 // pred_region
    _
  $region13: #{overlap_patch_embed.3} parent=0 // pred_fallthru
    _
  // Predicated region
  $region14: #{overlap_patch_embed.3} parent=0 // pred_check
    _
  $region15: #{overlap_patch_embed.3} parent=0 // pred_check_branch
    %17 = sbr.rel (0) target = $region17
  $region16: #{overlap_patch_embed.3} parent=0 // pred_region
    _
  $region17: #{overlap_patch_embed.3} parent=0 // pred_fallthru
    _
  // Predicated region
  $region18: #{overlap_patch_embed.3} parent=0 // pred_check
    _
  $region19: #{overlap_patch_embed.3} parent=0 // pred_check_branch
    %19 = sbr.rel (0) target = $region21
  $region20: #{overlap_patch_embed.3} parent=0 // pred_region
    _
  $region21: #{overlap_patch_embed.3} parent=0 // pred_fallthru
    _
  %v20 = vld [vmem:[%s1] sm:$0xff]
  %v21 = vld [vmem:[%s1 + $0x8] sm:$0xff]
  %v22 = vld [vmem:[%s1 + $0x10] sm:$0xff]
  %v23 = vld [vmem:[%s1 + $0x18] sm:$0xff]
  %v24 = vmul.f32 %v20, 0.03125
  %v25 = vmul.f32 %v21, 0.03125
  %v26 = vmul.f32 %v22, 0.03125
  %v27 = vmul.f32 %v23, 0.03125
  %v28 = vld [vmem:[%s2] sm:$0xff]
  %v29 = vld [vmem:[%s2 + $0x8] sm:$0xff]
  %v30 = vld [vmem:[%s2 + $0x10] sm:$0xff]
  %v31 = vld [vmem:[%s2 + $0x18] sm:$0xff]
  %v32 = vmul.f32 %v28, 0.03125
  %v33 = vmul.f32 %v29, 0.03125
  %v34 = vmul.f32 %v30, 0.03125
  %v35 = vmul.f32 %v31, 0.03125
  %v36 = vmul.f32 %v24, %v24
  %v37 = vmul.f32 %v25, %v25
  %v38 = vmul.f32 %v26, %v26
  %v39 = vmul.f32 %v27, %v27
  %v40 = vsub.f32 %v32, %v36
  %v41 = vsub.f32 %v33, %v37
  %v42 = vsub.f32 %v34, %v38
  %v43 = vsub.f32 %v35, %v39
  %v44 = vmax.f32 %v40, 0.0
  %v45 = vmax.f32 %v41, 0.0
  %v46 = vmax.f32 %v42, 0.0
  %v47 = vmax.f32 %v43, 0.0
  %v48 = vld [vmem:[%s3] sm:$0xff]
  %v49 = vld [vmem:[%s3 + $0x8] sm:$0xff]
  %v50 = vld [vmem:[%s3 + $0x10] sm:$0xff]
  %v51 = vld [vmem:[%s3 + $0x18] sm:$0xff]
  %v52 = vadd.f32 %v44, 1e-05
  %v53 = vadd.f32 %v45, 1e-05
  %v54 = vadd.f32 %v46, 1e-05
  %v55 = vadd.f32 %v47, 1e-05
  %v56 = vrsqrt.pop %v52
  %v57 = vrsqrt.pop %v53
  %v58 = vrsqrt.pop %v54
  %v59 = vrsqrt.pop %v55
  %v60 = vmul.f32 %v48, %v56
  %v61 = vmul.f32 %v49, %v57
  %v62 = vmul.f32 %v50, %v58
  %v63 = vmul.f32 %v51, %v59
  %v64 = vld [vmem:[%s4] sm:$0xff]
  %v65 = vld [vmem:[%s4 + $0x8] sm:$0xff]
  %v66 = vld [vmem:[%s4 + $0x10] sm:$0xff]
  %v67 = vld [vmem:[%s4 + $0x18] sm:$0xff]
  %v68 = vmul.f32 %v24, %v60
  %v69 = vmul.f32 %v25, %v61
  %v70 = vmul.f32 %v26, %v62
  %v71 = vmul.f32 %v27, %v63
  %v72 = vsub.f32 %v64, %v68
  %v73 = vsub.f32 %v65, %v69
  %v74 = vsub.f32 %v66, %v70
  %v75 = vsub.f32 %v67, %v71
  %v76 = vld [vmem:[%s0] sm:$0xff]
  %v77 = vld [vmem:[%s0 + $0x8] sm:$0xff]
  %v78 = vld [vmem:[%s0 + $0x10] sm:$0xff]
  %v79 = vld [vmem:[%s0 + $0x18] sm:$0xff]
  %81 = vset.pattern.permute.xlu0 0
  %82 = vperm.xlu0 %81, %v60
  %v83 = vpop.permute.xlu0 %82
  %86 = vset.pattern.permute.xlu0 0
  %87 = vperm.xlu0 %86, %v61
  %v88 = vpop.permute.xlu0 %87
  %91 = vset.pattern.permute.xlu0 0
  %92 = vperm.xlu0 %91, %v62
  %v93 = vpop.permute.xlu0 %92
  %96 = vset.pattern.permute.xlu0 0
  %97 = vperm.xlu0 %96, %v63
  %v98 = vpop.permute.xlu0 %97
  %v100 = vmul.f32 %v76, %v83
  %v101 = vmul.f32 %v77, %v88
  %v102 = vmul.f32 %v78, %v93
  %v103 = vmul.f32 %v79, %v98
  %105 = vset.pattern.permute.xlu0 0
  %106 = vperm.xlu0 %105, %v72
  %v107 = vpop.permute.xlu0 %106
  %110 = vset.pattern.permute.xlu0 0
  %111 = vperm.xlu0 %110, %v73
  %v112 = vpop.permute.xlu0 %111
  %115 = vset.pattern.permute.xlu0 0
  %116 = vperm.xlu0 %115, %v74
  %v117 = vpop.permute.xlu0 %116
  %120 = vset.pattern.permute.xlu0 0
  %121 = vperm.xlu0 %120, %v75
  %v122 = vpop.permute.xlu0 %121
  %v124 = vadd.f32 %v100, %v107
  %v125 = vadd.f32 %v101, %v112
  %v126 = vadd.f32 %v102, %v117
  %v127 = vadd.f32 %v103, %v122
  %128 = vst [vmem:[%s5] sm:$0xff] %v124
  %129 = vst [vmem:[%s5 + $0x8] sm:$0xff] %v125
  %130 = vst [vmem:[%s5 + $0x10] sm:$0xff] %v126
  %131 = vst [vmem:[%s5 + $0x18] sm:$0xff] %v127
  // Predicated region
  $region22: #{overlap_patch_embed.3} parent=0 // pred_check
    _
  $region23: #{overlap_patch_embed.3} parent=0 // pred_check_branch
    %133 = sbr.rel (0) target = $region25
  $region24: #{overlap_patch_embed.3} parent=0 // pred_region
    _
  $region25: #{overlap_patch_embed.3} parent=0 // pred_fallthru
    _
  // Predicated region
  $region26: #{overlap_patch_embed.3} parent=0 // pred_check
    _
  $region27: #{overlap_patch_embed.3} parent=0 // pred_check_branch
    %135 = sbr.rel (0) target = $region29
  $region28: #{overlap_patch_embed.3} parent=0 // pred_region
    _
  $region29: #{overlap_patch_embed.3} parent=0 // pred_fallthru
    _

// kernel: overlap_patch_embed.2
$region0: #{overlap_patch_embed.2}
  #allocation0 [shape = 'u32[]', space=smem, size = 0x4, offset = 0x4, fixed_abs, tag = 'smem constant byte address 0x4 - core index']
  #allocation1 [shape = 'u32[144,128]{1,0:T(1,128)}', space=vmem, size = 0x12000, scoped, tag = 'internal scratch']
  %s0 = inlined_call_operand.vmem [shape: bf16[32,256], index: 0, kind: input, shape index: {}]
  %s1 = inlined_call_operand.vmem [shape: bf16[256,128], index: 1, kind: input, shape index: {}]
  %s2 = inlined_call_operand.vmem [shape: f32[32,128], index: 2, kind: output, shape index: {0}]
  %s3 = inlined_call_operand.vmem [shape: f32[32,1], index: 3, kind: output, shape index: {1}]
  %s4 = inlined_call_operand.vmem [shape: f32[32,1], index: 4, kind: output, shape index: {2}]
  %5 = xla_tuple %s2, %s3, %s4
  %s6 = sld [smem:[#allocation0]]
  $region38: #{overlap_patch_embed.2} parent=0
    _
  %s8 = ssub.s32 1, %s6
  %s9 = scalar_select 0, %s8, %s6
  // Predicated region
  $region2: #{overlap_patch_embed.2} parent=0 // pred_check
    _
  $region3: #{overlap_patch_embed.2} parent=0 // pred_check_branch
    %11 = sbr.rel (0) target = $region5
  $region4: #{overlap_patch_embed.2} parent=0 // pred_region
    _
  $region5: #{overlap_patch_embed.2} parent=0 // pred_fallthru
    _
  // Predicated region
  $region6: #{overlap_patch_embed.2} parent=0 // pred_check
    _
  $region7: #{overlap_patch_embed.2} parent=0 // pred_check_branch
    %13 = sbr.rel (0) target = $region9
  $region8: #{overlap_patch_embed.2} parent=0 // pred_region
    _
  $region9: #{overlap_patch_embed.2} parent=0 // pred_fallthru
    _
  %v15 = vld [vmem:[%s0] sm:$0xff]
  %v16 = vld [vmem:[%s0 + $0x8] sm:$0xff]
  %v17 = vld [vmem:[%s0 + $0x10] sm:$0xff]
  %v18 = vld [vmem:[%s0 + $0x18] sm:$0xff]
  %v19 = vld [vmem:[%s1] sm:$0xf]
  %v20 = vld [vmem:[%s1 + $0x4] sm:$0xf]
  %v21 = vld [vmem:[%s1 + $0x8] sm:$0xf]
  %v22 = vld [vmem:[%s1 + $0xc] sm:$0xf]
  %v23 = vld [vmem:[%s1 + $0x10] sm:$0xf]
  %v24 = vld [vmem:[%s1 + $0x14] sm:$0xf]
  %v25 = vld [vmem:[%s1 + $0x18] sm:$0xf]
  %v26 = vld [vmem:[%s1 + $0x1c] sm:$0xf]
  %v27 = vld [vmem:[%s1 + $0x20] sm:$0xf]
  %v28 = vld [vmem:[%s1 + $0x24] sm:$0xf]
  %v29 = vld [vmem:[%s1 + $0x28] sm:$0xf]
  %v30 = vld [vmem:[%s1 + $0x2c] sm:$0xf]
  %v31 = vld [vmem:[%s1 + $0x30] sm:$0xf]
  %v32 = vld [vmem:[%s1 + $0x34] sm:$0xf]
  %v33 = vld [vmem:[%s1 + $0x38] sm:$0xf]
  %v34 = vld [vmem:[%s1 + $0x3c] sm:$0xf]
  %v35 = vld [vmem:[%s1 + $0x40] sm:$0xf]
  %v36 = vld [vmem:[%s1 + $0x44] sm:$0xf]
  %v37 = vld [vmem:[%s1 + $0x48] sm:$0xf]
  %v38 = vld [vmem:[%s1 + $0x4c] sm:$0xf]
  %v39 = vld [vmem:[%s1 + $0x50] sm:$0xf]
  %v40 = vld [vmem:[%s1 + $0x54] sm:$0xf]
  %v41 = vld [vmem:[%s1 + $0x58] sm:$0xf]
  %v42 = vld [vmem:[%s1 + $0x5c] sm:$0xf]
  %v43 = vld [vmem:[%s1 + $0x60] sm:$0xf]
  %v44 = vld [vmem:[%s1 + $0x64] sm:$0xf]
  %v45 = vld [vmem:[%s1 + $0x68] sm:$0xf]
  %v46 = vld [vmem:[%s1 + $0x6c] sm:$0xf]
  %v47 = vld [vmem:[%s1 + $0x70] sm:$0xf]
  %v48 = vld [vmem:[%s1 + $0x74] sm:$0xf]
  %v49 = vld [vmem:[%s1 + $0x78] sm:$0xf]
  %v50 = vld [vmem:[%s1 + $0x7c] sm:$0xf]
  %v55 = vunpack.c.l.b16 %v15
  %v56 = vunpack.c.h.b16 %v15
  %v57 = vunpack.c.l.b16 %v16
  %v58 = vunpack.c.h.b16 %v16
  %v59 = vunpack.c.l.b16 %v17
  %v60 = vunpack.c.h.b16 %v17
  %v61 = vunpack.c.l.b16 %v18
  %v62 = vunpack.c.h.b16 %v18
  %v63 = vpack.c.b16 %v57, %v55
  %v64 = vpack.c.b16 %v58, %v56
  %v65 = vpack.c.b16 %v61, %v59
  %v66 = vpack.c.b16 %v62, %v60
  %v103 = vunpack.c.l.b16 %v19
  %v104 = vunpack.c.l.b16 %v20
  %v105 = vunpack.c.l.b16 %v21
  %v106 = vunpack.c.l.b16 %v22
  %v107 = vunpack.c.l.b16 %v23
  %v108 = vunpack.c.l.b16 %v24
  %v109 = vunpack.c.l.b16 %v25
  %v110 = vunpack.c.l.b16 %v26
  %v111 = vunpack.c.l.b16 %v27
  %v112 = vunpack.c.l.b16 %v28
  %v113 = vunpack.c.l.b16 %v29
  %v114 = vunpack.c.l.b16 %v30
  %v115 = vunpack.c.l.b16 %v31
  %v116 = vunpack.c.l.b16 %v32
  %v117 = vunpack.c.l.b16 %v33
  %v118 = vunpack.c.l.b16 %v34
  %v119 = vunpack.c.l.b16 %v35
  %v120 = vunpack.c.l.b16 %v36
  %v121 = vunpack.c.l.b16 %v37
  %v122 = vunpack.c.l.b16 %v38
  %v123 = vunpack.c.l.b16 %v39
  %v124 = vunpack.c.l.b16 %v40
  %v125 = vunpack.c.l.b16 %v41
  %v126 = vunpack.c.l.b16 %v42
  %v127 = vunpack.c.l.b16 %v43
  %v128 = vunpack.c.l.b16 %v44
  %v129 = vunpack.c.l.b16 %v45
  %v130 = vunpack.c.l.b16 %v46
  %v131 = vunpack.c.l.b16 %v47
  %v132 = vunpack.c.l.b16 %v48
  %v133 = vunpack.c.l.b16 %v49
  %v134 = vunpack.c.l.b16 %v50
  %v135 = vpack.c.b16 %v104, %v103
  %v136 = vpack.c.b16 %v106, %v105
  %v137 = vpack.c.b16 %v108, %v107
  %v138 = vpack.c.b16 %v110, %v109
  %v139 = vpack.c.b16 %v112, %v111
  %v140 = vpack.c.b16 %v114, %v113
  %v141 = vpack.c.b16 %v116, %v115
  %v142 = vpack.c.b16 %v118, %v117
  %v143 = vpack.c.b16 %v120, %v119
  %v144 = vpack.c.b16 %v122, %v121
  %v145 = vpack.c.b16 %v124, %v123
  %v146 = vpack.c.b16 %v126, %v125
  %v147 = vpack.c.b16 %v128, %v127
  %v148 = vpack.c.b16 %v130, %v129
  %v149 = vpack.c.b16 %v132, %v131
  %v150 = vpack.c.b16 %v134, %v133
  %167 = vmatprep.subr.bf16.mxu0 0
  %168 = vmatpush1.bf16.msra.mxu0 %v142
  %169 = vmatprep.subr.bf16.mxu0 0
  %170 = vmatpush1.bf16.msra.mxu0 %v141
  %171 = vmatprep.subr.bf16.mxu0 0
  %172 = vmatpush1.bf16.msra.mxu0 %v140
  %173 = vmatprep.subr.bf16.mxu0 0
  %174 = vmatpush1.bf16.msra.mxu0 %v139
  %175 = vmatprep.subr.bf16.mxu0 0
  %176 = vmatpush1.bf16.msra.mxu0 %v138
  %177 = vmatprep.subr.bf16.mxu0 0
  %178 = vmatpush1.bf16.msra.mxu0 %v137
  %179 = vmatprep.subr.bf16.mxu0 0
  %180 = vmatpush1.bf16.msra.mxu0 %v136
  %181 = vmatprep.subr.bf16.mxu0 0
  %182 = vmatpush1.bf16.msra.mxu0 %v135
  %183 = vmatprep.subr.bf16.mxu0 0
  %184 = vmatpush2.bf16.msra.mxu0 %v150
  %185 = vmatprep.subr.bf16.mxu0 0
  %186 = vmatpush2.bf16.msra.mxu0 %v149
  %187 = vmatprep.subr.bf16.mxu0 0
  %188 = vmatpush2.bf16.msra.mxu0 %v148
  %189 = vmatprep.subr.bf16.mxu0 0
  %190 = vmatpush2.bf16.msra.mxu0 %v147
  %191 = vmatprep.subr.bf16.mxu0 0
  %192 = vmatpush2.bf16.msra.mxu0 %v146
  %193 = vmatprep.subr.bf16.mxu0 0
  %194 = vmatpush2.bf16.msra.mxu0 %v145
  %195 = vmatprep.subr.bf16.mxu0 0
  %196 = vmatpush2.bf16.msra.mxu0 %v144
  %197 = vmatprep.subr.bf16.mxu0 0
  %198 = vmatpush2.bf16.msra.mxu0 %v143
  %199 = vmatprep.mubr.bf16.mxu0 %v64
  %200 = vmatmul.mubr.bf16.gmra.mxu0 %v63
  %v201 = vpop.f32.mrf.mxu0
  %v202 = vadd.f32 0.0, %v201
  %v203 = vpop.f32.mrf.mxu0
  %v204 = vpop.f32.mrf.mxu0
  %v205 = vadd.f32 0.0, %v204
  %v206 = vpop.f32.mrf.mxu0
  %207 = vmatprep.mubr.bf16.mxu0 %v66
  %208 = vmatmul.mubr.bf16.gmra.mxu0 %v65
  %v209 = vpop.f32.mrf.mxu0
  %v210 = vadd.f32 0.0, %v209
  %v211 = vpop.f32.mrf.mxu0
  %v212 = vpop.f32.mrf.mxu0
  %v213 = vadd.f32 0.0, %v212
  %v214 = vpop.f32.mrf.mxu0
  %215 = vdwg.mxu0
  %216 = vst [vmem:[%s2] sm:$0xff] %v202
  %217 = vst [vmem:[%s2 + $0x8] sm:$0xff] %v205
  %218 = vst [vmem:[%s2 + $0x10] sm:$0xff] %v210
  %219 = vst [vmem:[%s2 + $0x18] sm:$0xff] %v213
  %p220 = scmp.eq.s32.totalorder 0, 0
  // Predicated region
  $region10: #{overlap_patch_embed.2} parent=0 // pred_check
    %p221 = pneg %p220
  $region11: #{overlap_patch_embed.2} parent=0 // pred_check_branch
    %223 = sbr.rel (%p221) target = $region13
  $region12: #{overlap_patch_embed.2} parent=0 // pred_region
    %vm224 = vcmask 7168
    %225 = vst.msk [vmem:[%s3] sm:$0xff] %vm224, 0.0
    %226 = vst.msk [vmem:[%s3 + $0x8] sm:$0xff] %vm224, 0.0
    %227 = vst.msk [vmem:[%s3 + $0x10] sm:$0xff] %vm224, 0.0
    %228 = vst.msk [vmem:[%s3 + $0x18] sm:$0xff] %vm224, 0.0
    %229 = vst.msk [vmem:[%s4] sm:$0xff] %vm224, 0.0
    %230 = vst.msk [vmem:[%s4 + $0x8] sm:$0xff] %vm224, 0.0
    %231 = vst.msk [vmem:[%s4 + $0x10] sm:$0xff] %vm224, 0.0
    %232 = vst.msk [vmem:[%s4 + $0x18] sm:$0xff] %vm224, 0.0
  $region13: #{overlap_patch_embed.2} parent=0 // pred_fallthru
    _
  %v233 = vld [vmem:[%s3] sm:$0xff]
  %v234 = vld [vmem:[%s3 + $0x8] sm:$0xff]
  %v235 = vld [vmem:[%s3 + $0x10] sm:$0xff]
  %v236 = vld [vmem:[%s3 + $0x18] sm:$0xff]
  %237 = vadd.xlane.f32.xlu0 %v202
  %v238 = vpop.xlane.xlu0 %237
  %239 = vadd.xlane.f32.xlu0 %v205
  %v240 = vpop.xlane.xlu0 %239
  %241 = vadd.xlane.f32.xlu0 %v210
  %v242 = vpop.xlane.xlu0 %241
  %243 = vadd.xlane.f32.xlu0 %v213
  %v244 = vpop.xlane.xlu0 %243
  %v245 = vadd.f32 %v233, %v238
  %v246 = vadd.f32 %v234, %v240
  %v247 = vadd.f32 %v235, %v242
  %v248 = vadd.f32 %v236, %v244
  %vm249 = vcmask 7168
  %250 = vst.msk [vmem:[%s3] sm:$0xff] %vm249, %v245
  %251 = vst.msk [vmem:[%s3 + $0x8] sm:$0xff] %vm249, %v246
  %252 = vst.msk [vmem:[%s3 + $0x10] sm:$0xff] %vm249, %v247
  %253 = vst.msk [vmem:[%s3 + $0x18] sm:$0xff] %vm249, %v248
  %v254 = vld [vmem:[%s4] sm:$0xff]
  %v255 = vld [vmem:[%s4 + $0x8] sm:$0xff]
  %v256 = vld [vmem:[%s4 + $0x10] sm:$0xff]
  %v257 = vld [vmem:[%s4 + $0x18] sm:$0xff]
  %v258 = vmul.f32 %v202, %v202
  %v259 = vmul.f32 %v205, %v205
  %v260 = vmul.f32 %v210, %v210
  %v261 = vmul.f32 %v213, %v213
  %262 = vadd.xlane.f32.xlu0 %v258
  %v263 = vpop.xlane.xlu0 %262
  %264 = vadd.xlane.f32.xlu0 %v259
  %v265 = vpop.xlane.xlu0 %264
  %266 = vadd.xlane.f32.xlu0 %v260
  %v267 = vpop.xlane.xlu0 %266
  %268 = vadd.xlane.f32.xlu0 %v261
  %v269 = vpop.xlane.xlu0 %268
  %v270 = vadd.f32 %v254, %v263
  %v271 = vadd.f32 %v255, %v265
  %v272 = vadd.f32 %v256, %v267
  %v273 = vadd.f32 %v257, %v269
  %274 = vst.msk [vmem:[%s4] sm:$0xff] %vm249, %v270
  %275 = vst.msk [vmem:[%s4 + $0x8] sm:$0xff] %vm249, %v271
  %276 = vst.msk [vmem:[%s4 + $0x10] sm:$0xff] %vm249, %v272
  %277 = vst.msk [vmem:[%s4 + $0x18] sm:$0xff] %vm249, %v273
  // Predicated region
  $region14: #{overlap_patch_embed.2} parent=0 // pred_check
    _
  $region15: #{overlap_patch_embed.2} parent=0 // pred_check_branch
    %279 = sbr.rel (0) target = $region17
  $region16: #{overlap_patch_embed.2} parent=0 // pred_region
    _
  $region17: #{overlap_patch_embed.2} parent=0 // pred_fallthru
    _
  // Predicated region
  $region18: #{overlap_patch_embed.2} parent=0 // pred_check
    _
  $region19: #{overlap_patch_embed.2} parent=0 // pred_check_branch
    %281 = sbr.rel (0) target = $region21
  $region20: #{overlap_patch_embed.2} parent=0 // pred_region
    _
  $region21: #{overlap_patch_embed.2} parent=0 // pred_fallthru
    _
  // Predicated region
  $region22: #{overlap_patch_embed.2} parent=0 // pred_check
    _
  $region23: #{overlap_patch_embed.2} parent=0 // pred_check_branch
    %283 = sbr.rel (0) target = $region25
  $region24: #{overlap_patch_embed.2} parent=0 // pred_region
    _
  $region25: #{overlap_patch_embed.2} parent=0 // pred_fallthru
    _
  // Predicated region
  $region26: #{overlap_patch_embed.2} parent=0 // pred_check
    _
  $region27: #{overlap_patch_embed.2} parent=0 // pred_check_branch
    %285 = sbr.rel (0) target = $region29
  $region28: #{overlap_patch_embed.2} parent=0 // pred_region
    _
  $region29: #{overlap_patch_embed.2} parent=0 // pred_fallthru
    _
  // Predicated region
  $region30: #{overlap_patch_embed.2} parent=0 // pred_check
    _
  $region31: #{overlap_patch_embed.2} parent=0 // pred_check_branch
    %287 = sbr.rel (0) target = $region33
  $region32: #{overlap_patch_embed.2} parent=0 // pred_region
    _
  $region33: #{overlap_patch_embed.2} parent=0 // pred_fallthru
    _
  // Predicated region
  $region34: #{overlap_patch_embed.2} parent=0 // pred_check
    _
  $region35: #{overlap_patch_embed.2} parent=0 // pred_check_branch
    %289 = sbr.rel (0) target = $region37
  $region36: #{overlap_patch_embed.2} parent=0 // pred_region
    _
  $region37: #{overlap_patch_embed.2} parent=0 // pred_fallthru
    _

</llo_original>
